<compile_context>
chip_gen: v7x
topology: tpu7x:2x2x1
jax: 0.10.0
libtpu: 0.0.40
codegen_flags: <defaults>
</compile_context>

<pallas_src>
import jax
import jax.numpy as jnp
from jax import lax
from jax.experimental import pallas as pl
from jax.experimental.pallas import tpu as pltpu


# ----------------------------------------------------------------------------
# Weight packing helpers (all run once in the wrapper, outside the kernel).
# ----------------------------------------------------------------------------
def _packed_1x1(w, w_in, w_out, stride, offset, dtype=None):
    """Lane-packed block weight for a 1x1 conv applied to (rows, W*Cin) data.

    out[(wi*Ci + ci), (wo*Co + co)] = w[ci, co] if wi == wo*stride + offset else 0

    `offset` produces a W-shifted copy (zero-filled at the boundary),
    `stride` performs the W subsampling of a strided conv.
    """
    ci, co = w.shape
    sel = (jnp.arange(w_in)[:, None] ==
           (stride * jnp.arange(w_out)[None, :] + offset)).astype(w.dtype)
    out = (sel[:, None, :, None] * w[None, :, None, :]).reshape(w_in * ci, w_out * co)
    return out if dtype is None else out.astype(dtype)


def _pack_depthwise(wdw_scaled, W, Cexp):
    """(9, Cexp) per-channel taps -> (9, W*Cexp) lane-packed tap weights with the
    W-direction zero padding of the 3x3 conv baked in (boundary taps zeroed)."""
    wdw_scaled = wdw_scaled.reshape(3, 3, Cexp)
    w_ids = jnp.arange(W)
    rows = []
    for ki in range(3):
        for kj in range(3):
            valid = ((w_ids + (kj - 1)) >= 0) & ((w_ids + (kj - 1)) < W)
            rows.append((valid[:, None] * wdw_scaled[ki, kj][None, :]).reshape(W * Cexp))
    return jnp.stack(rows, 0).astype(jnp.float32)


# ----------------------------------------------------------------------------
# Kernel
# ----------------------------------------------------------------------------
def _make_kernel(H, W, Cexp, Cout, stride, add_shortcut, sc_has_conv):
    Ho = (H - 1) // stride + 1
    Wo = (W - 1) // stride + 1
    WC = W * Cexp

    def kernel(*refs):
        if sc_has_conv:
            (x_ref, wexp_ref, b1_ref, bsc_ref, wdw_ref, b2_ref,
             w3_ref, b3_ref, out_ref, dw_ref) = refs
        else:
            (x_ref, wexp_ref, b1_ref, wdw_ref, b2_ref,
             w3_ref, b3_ref, out_ref, dw_ref) = refs

        x = x_ref[0]                                   # (H, W*Cin) f32, lane-packed
        xb = x.astype(jnp.bfloat16)

        # Fused 1x1 convs on the MXU (bf16 in, f32 accumulate): one wide
        # block-structured weight produces the expansion output, its two
        # W-shifted copies, and (if present) the 1x1 shortcut branch.
        hcat = jnp.dot(xb, wexp_ref[...], preferred_element_type=jnp.float32)
        a = jnp.clip(hcat[:, :3 * WC] + b1_ref[...], 0.0, 6.0)   # (H, 3*W*Cexp)
        if sc_has_conv:
            sc = hcat[:, 3 * WC:] + bsc_ref[...]                 # (H, W*Cout)

        # 3x3 depthwise conv. Only the row direction needs a halo; the two halo
        # rows are re-zeroed every step (zeroing them once under
        # pl.when(program_id==0) would be stale on the second TensorCore when
        # the batch axis is sharded with "parallel" semantics).
        dw_ref[0:1, :] = jnp.zeros((1, 3 * WC), jnp.float32)
        dw_ref[H + 1:H + 2, :] = jnp.zeros((1, 3 * WC), jnp.float32)
        dw_ref[1:H + 1, :] = a

        acc = jnp.zeros((Ho, WC), jnp.float32)
        for ki in range(3):
            for kj in range(3):
                if stride == 1:
                    tap = dw_ref[ki:ki + Ho, kj * WC:(kj + 1) * WC]
                else:
                    tap = dw_ref[pl.ds(ki, Ho, stride=stride),
                                 kj * WC:(kj + 1) * WC]
                idx = ki * 3 + kj
                acc = acc + tap * wdw_ref[idx:idx + 1, :]        # VPU, f32
        h2 = jnp.clip(acc + b2_ref[...], 0.0, 6.0)               # (Ho, W*Cexp)

        # 1x1 projection on the MXU; the block weight also performs the W
        # subsampling for stride>1, so the result is already lane-dense
        # (Ho, Wo*Cout) and the output store is a full-lane vst.
        h3 = jnp.dot(h2.astype(jnp.bfloat16), w3_ref[...],
                     preferred_element_type=jnp.float32) + b3_ref[...]

        if add_shortcut:
            h3 = h3 + (sc if sc_has_conv else x)   # identity: Cin == Cout, same packing
        out_ref[0] = h3.astype(out_ref.dtype)

    return kernel, Ho, Wo


# ----------------------------------------------------------------------------
# Wrapper
# ----------------------------------------------------------------------------
def bottleneck_pallas(x_nchw, p, *, stride):
    N, Cin, H, W = x_nchw.shape
    Cexp = p["w1"].shape[1]
    Cout = p["w3"].shape[1]
    add_shortcut = (stride == 1)
    sc_has_conv = add_shortcut and (Cin != Cout)

    kernel, Ho, Wo = _make_kernel(H, W, Cexp, Cout, stride, add_shortcut,
                                  sc_has_conv)
    WC = W * Cexp

    # ---- fold BN scales into the conv weights and lane-pack everything ----
    w1s = p["w1"] * p["s1"]                                      # (Cin, Cexp)
    regions = [_packed_1x1(w1s, W, W, 1, dj) for dj in (-1, 0, 1)]
    if sc_has_conv:
        regions.append(_packed_1x1(p["wsc"] * p["ssc"], W, W, 1, 0))
    wexp = jnp.concatenate(regions, axis=1).astype(jnp.bfloat16)  # (W*Cin, 3*WC[+W*Cout])
    b1p = jnp.tile(p["b1"], (1, 3 * W))                           # (1, 3*WC)
    wdwp = _pack_depthwise(p["wdw"] * p["s2"], W, Cexp)           # (9, WC)
    b2p = jnp.tile(p["b2"], (1, W))                               # (1, WC)
    w3p = _packed_1x1(p["w3"] * p["s3"], W, Wo, stride, 0, jnp.bfloat16)  # (WC, Wo*Cout)
    b3p = jnp.tile(p["b3"], (1, Wo))                              # (1, Wo*Cout)

    # NCHW -> packed NHWC (rows, W*Cin). Kept at the boundary for the demo.
    xp = jnp.transpose(x_nchw, (0, 2, 3, 1)).reshape(N, H, W * Cin)

    inputs = [xp, wexp, b1p]
    if sc_has_conv:
        inputs.append(jnp.tile(p["bsc"], (1, W)))
    inputs += [wdwp, b2p, w3p, b3p]

    in_specs = [pl.BlockSpec((1, H, W * Cin), lambda n: (n, 0, 0))]
    in_specs += [pl.BlockSpec(a.shape, lambda n: (0, 0)) for a in inputs[1:]]

    grid_spec = pltpu.PrefetchScalarGridSpec(
        num_scalar_prefetch=0,
        grid=(N,),
        in_specs=in_specs,
        out_specs=pl.BlockSpec((1, Ho, Wo * Cout), lambda n: (n, 0, 0)),
        scratch_shapes=[pltpu.VMEM((H + 2, 3 * WC), jnp.float32)],
    )

    out = pl.pallas_call(
        kernel,
        out_shape=jax.ShapeDtypeStruct((N, Ho, Wo * Cout), jnp.float32),
        grid_spec=grid_spec,
        compiler_params=pltpu.CompilerParams(
            dimension_semantics=("parallel",)),   # batch axis -> 2 TCs on v7x
    )(*inputs)

    return jnp.transpose(out.reshape(N, Ho, Wo, Cout), (0, 3, 1, 2))


# ----------------------------------------------------------------------------
# Parameter init (BN folded into per-channel scale/bias) and pure-JAX reference
# ----------------------------------------------------------------------------
def init_params(key, Cin, Cout, t, stride, eps=1e-5):
    Cexp = Cin * t
    keys = jax.random.split(key, 8)

    def bn(k, C):
        kg, kb, km, kv = jax.random.split(k, 4)
        gamma = 1.0 + 0.1 * jax.random.normal(kg, (C,), jnp.float32)
        beta = 0.1 * jax.random.normal(kb, (C,), jnp.float32)
        mean = 0.1 * jax.random.normal(km, (C,), jnp.float32)
        var = jnp.abs(jax.random.normal(kv, (C,), jnp.float32)) + 0.5
        scale = gamma / jnp.sqrt(var + eps)
        bias = beta - mean * scale
        return scale.reshape(1, C), bias.reshape(1, C)

    p = {}
    w1_pt = 0.1 * jax.random.normal(keys[0], (Cexp, Cin, 1, 1), jnp.float32)
    p["w1"] = jnp.transpose(w1_pt[:, :, 0, 0], (1, 0))                    # (Cin, Cexp)
    p["s1"], p["b1"] = bn(keys[1], Cexp)

    wdw_pt = 0.1 * jax.random.normal(keys[2], (Cexp, 1, 3, 3), jnp.float32)
    p["wdw"] = jnp.transpose(wdw_pt[:, 0], (1, 2, 0)).reshape(9, Cexp)    # (9, Cexp)
    p["s2"], p["b2"] = bn(keys[3], Cexp)

    w3_pt = 0.1 * jax.random.normal(keys[4], (Cout, Cexp, 1, 1), jnp.float32)
    p["w3"] = jnp.transpose(w3_pt[:, :, 0, 0], (1, 0))                    # (Cexp, Cout)
    p["s3"], p["b3"] = bn(keys[5], Cout)

    if stride == 1 and Cin != Cout:
        wsc_pt = 0.1 * jax.random.normal(keys[6], (Cout, Cin, 1, 1), jnp.float32)
        p["wsc"] = jnp.transpose(wsc_pt[:, :, 0, 0], (1, 0))              # (Cin, Cout)
        p["ssc"], p["bsc"] = bn(keys[7], Cout)
    return p


def bottleneck_reference(x_nchw, p, *, stride):
    """Pure-JAX reference using the same folded-BN params and the same bf16
    rounding points as the kernel's MXU matmuls (f32 accumulation elsewhere)."""
    hi = lax.Precision.HIGHEST
    bf = lambda a: a.astype(jnp.bfloat16).astype(jnp.float32)
    x = jnp.transpose(x_nchw, (0, 2, 3, 1)).astype(jnp.float32)
    Cin = x.shape[-1]
    Cexp = p["w1"].shape[1]
    Cout = p["w3"].shape[1]

    h = jnp.einsum("nhwc,cd->nhwd", bf(x), bf(p["w1"] * p["s1"]), precision=hi)
    h = jnp.clip(h + p["b1"], 0.0, 6.0)

    wdw = (p["wdw"] * p["s2"]).reshape(3, 3, Cexp)[:, :, None, :]         # HWIO
    h = lax.conv_general_dilated(
        h, wdw, window_strides=(stride, stride), padding=((1, 1), (1, 1)),
        dimension_numbers=("NHWC", "HWIO", "NHWC"),
        feature_group_count=Cexp, precision=hi)
    h = jnp.clip(h + p["b2"], 0.0, 6.0)

    h = jnp.einsum("nhwc,cd->nhwd", bf(h), bf(p["w3"] * p["s3"]),
                   precision=hi) + p["b3"]

    if stride == 1:
        if Cin != Cout:
            sc = jnp.einsum("nhwc,cd->nhwd", bf(x), bf(p["wsc"] * p["ssc"]),
                            precision=hi) + p["bsc"]
        else:
            sc = x
        h = h + sc
    return jnp.transpose(h, (0, 3, 1, 2))


if __name__ == "__main__":
    key = jax.random.PRNGKey(0)
    kx, kp = jax.random.split(key)

    # BottleNeck(in=4, out=8, stride=1, t=2) at small spatial size.
    N, Cin, H, W = 2, 4, 16, 16
    Cout, t, stride = 8, 2, 1

    x = jax.random.normal(kx, (N, Cin, H, W), jnp.float32)
    params = init_params(kp, Cin, Cout, t, stride)

    out = jax.block_until_ready(bottleneck_pallas(x, params, stride=stride))
    ref = bottleneck_reference(x, params, stride=stride)

    assert out.shape == ref.shape == (N, Cout, H // stride, W // stride)
    max_err = float(jnp.max(jnp.abs(out - ref)))
    # Tolerance covers bf16 rounding of MXU inputs (intermediates can round to a
    # neighbouring bf16 value at rounding boundaries).
    if max_err > 5e-2:
        raise AssertionError(f"Pallas kernel mismatch vs reference: {max_err}")

    print("KERNEL_OK")
</pallas_src>

<mosaic_0001>
module attributes {stable_mosaic.version = 11 : i64} {
  func.func @kernel(%arg0: i32, %arg1: memref<1x16x64xf32, #tpu.memory_space<vmem>>, %arg2: memref<64x512xbf16, #tpu.memory_space<vmem>>, %arg3: memref<1x384xf32, #tpu.memory_space<vmem>>, %arg4: memref<1x128xf32, #tpu.memory_space<vmem>>, %arg5: memref<9x128xf32, #tpu.memory_space<vmem>>, %arg6: memref<1x128xf32, #tpu.memory_space<vmem>>, %arg7: memref<128x128xbf16, #tpu.memory_space<vmem>>, %arg8: memref<1x128xf32, #tpu.memory_space<vmem>>, %arg9: memref<1x16x128xf32, #tpu.memory_space<vmem>>, %arg10: memref<18x384xf32, #tpu.memory_space<vmem>>) attributes {dimension_semantics = [#tpu.dimension_semantics<parallel>], iteration_bounds = array<i64: 2>, scalar_prefetch = 0 : i64, scratch_operands = 1 : i64, tpu.core_type = #tpu.core_type<tc>, window_params = [{transform_indices = @transform_0, window_bounds = array<i64: 1, 16, 64>}, {pipeline_mode = #tpu.pipeline_mode<synchronous>, transform_indices = @transform_1, window_bounds = array<i64: 64, 512>}, {pipeline_mode = #tpu.pipeline_mode<synchronous>, transform_indices = @transform_2, window_bounds = array<i64: 1, 384>}, {pipeline_mode = #tpu.pipeline_mode<synchronous>, transform_indices = @transform_3, window_bounds = array<i64: 1, 128>}, {pipeline_mode = #tpu.pipeline_mode<synchronous>, transform_indices = @transform_4, window_bounds = array<i64: 9, 128>}, {pipeline_mode = #tpu.pipeline_mode<synchronous>, transform_indices = @transform_5, window_bounds = array<i64: 1, 128>}, {pipeline_mode = #tpu.pipeline_mode<synchronous>, transform_indices = @transform_6, window_bounds = array<i64: 128, 128>}, {pipeline_mode = #tpu.pipeline_mode<synchronous>, transform_indices = @transform_7, window_bounds = array<i64: 1, 128>}, {transform_indices = @transform_8, window_bounds = array<i64: 1, 16, 128>}]} {
    %c0 = arith.constant 0 : index
    %c0_0 = arith.constant 0 : index
    %c0_1 = arith.constant 0 : index
    %0 = vector.load %arg1[%c0, %c0_0, %c0_1] : memref<1x16x64xf32, #tpu.memory_space<vmem>>, vector<1x16x64xf32>
    %1 = vector.shape_cast %0 : vector<1x16x64xf32> to vector<16x64xf32>
    %2 = arith.truncf %1 : vector<16x64xf32> to vector<16x64xbf16>
    %c0_2 = arith.constant 0 : index
    %c0_3 = arith.constant 0 : index
    %3 = vector.load %arg2[%c0_2, %c0_3] : memref<64x512xbf16, #tpu.memory_space<vmem>>, vector<64x512xbf16>
    %cst = arith.constant dense<0.000000e+00> : vector<16x512xf32>
    %4 = tpu.matmul %2, %3, %cst {dimension_numbers = #tpu.dot_dimension_numbers<[1], [0], [0], [1], [0, 0, 1, 1], [], []>} : vector<16x64xbf16>, vector<64x512xbf16>, vector<16x512xf32> -> vector<16x512xf32>
    %5 = vector.extract_strided_slice %4 {offsets = [0, 0], sizes = [16, 384], strides = [1, 1]} : vector<16x512xf32> to vector<16x384xf32>
    %c0_4 = arith.constant 0 : index
    %c0_5 = arith.constant 0 : index
    %6 = vector.load %arg3[%c0_4, %c0_5] : memref<1x384xf32, #tpu.memory_space<vmem>>, vector<1x384xf32>
    %7 = vector.broadcast %6 : vector<1x384xf32> to vector<16x384xf32>
    %8 = arith.addf %5, %7 : vector<16x384xf32>
    %cst_6 = arith.constant 0.000000e+00 : f32
    %cst_7 = arith.constant 6.000000e+00 : f32
    %9 = vector.broadcast %cst_6 : f32 to vector<16x384xf32>
    %10 = arith.maximumf %9, %8 : vector<16x384xf32>
    %11 = vector.broadcast %cst_7 : f32 to vector<16x384xf32>
    %12 = arith.minimumf %11, %10 : vector<16x384xf32>
    %13 = vector.extract_strided_slice %4 {offsets = [0, 384], sizes = [16, 128], strides = [1, 1]} : vector<16x512xf32> to vector<16x128xf32>
    %c0_8 = arith.constant 0 : index
    %c0_9 = arith.constant 0 : index
    %14 = vector.load %arg4[%c0_8, %c0_9] : memref<1x128xf32, #tpu.memory_space<vmem>>, vector<1x128xf32>
    %15 = vector.broadcast %14 : vector<1x128xf32> to vector<16x128xf32>
    %16 = arith.addf %13, %15 : vector<16x128xf32>
    %cst_10 = arith.constant 0.000000e+00 : f32
    %17 = vector.broadcast %cst_10 : f32 to vector<1x384xf32>
    %c0_11 = arith.constant 0 : index
    %c0_12 = arith.constant 0 : index
    %18 = vector.load %arg10[%c0_11, %c0_12] : memref<18x384xf32, #tpu.memory_space<vmem>>, vector<1x384xf32>
    tpu.vector_store %arg10[%c0_11, %c0_12], %17 {strides = array<i32>} : memref<18x384xf32, #tpu.memory_space<vmem>>, vector<1x384xf32>,
    %cst_13 = arith.constant 0.000000e+00 : f32
    %19 = vector.broadcast %cst_13 : f32 to vector<1x384xf32>
    %c17 = arith.constant 17 : index
    %c0_14 = arith.constant 0 : index
    %20 = vector.load %arg10[%c17, %c0_14] : memref<18x384xf32, #tpu.memory_space<vmem>>, vector<1x384xf32>
    tpu.vector_store %arg10[%c17, %c0_14], %19 {strides = array<i32>} : memref<18x384xf32, #tpu.memory_space<vmem>>, vector<1x384xf32>,
    %c1 = arith.constant 1 : index
    %c0_15 = arith.constant 0 : index
    %21 = vector.load %arg10[%c1, %c0_15] : memref<18x384xf32, #tpu.memory_space<vmem>>, vector<16x384xf32>
    tpu.vector_store %arg10[%c1, %c0_15], %12 {strides = array<i32>} : memref<18x384xf32, #tpu.memory_space<vmem>>, vector<16x384xf32>,
    %cst_16 = arith.constant 0.000000e+00 : f32
    %22 = vector.broadcast %cst_16 : f32 to vector<16x128xf32>
    %c0_17 = arith.constant 0 : index
    %c0_18 = arith.constant 0 : index
    %23 = vector.load %arg10[%c0_17, %c0_18] : memref<18x384xf32, #tpu.memory_space<vmem>>, vector<16x128xf32>
    %c0_19 = arith.constant 0 : index
    %c0_20 = arith.constant 0 : index
    %24 = vector.load %arg5[%c0_19, %c0_20] : memref<9x128xf32, #tpu.memory_space<vmem>>, vector<1x128xf32>
    %25 = vector.broadcast %24 : vector<1x128xf32> to vector<16x128xf32>
    %26 = arith.mulf %23, %25 : vector<16x128xf32>
    %27 = arith.addf %22, %26 : vector<16x128xf32>
    %c0_21 = arith.constant 0 : index
    %c128 = arith.constant 128 : index
    %28 = vector.load %arg10[%c0_21, %c128] : memref<18x384xf32, #tpu.memory_space<vmem>>, vector<16x128xf32>
    %c1_22 = arith.constant 1 : index
    %c0_23 = arith.constant 0 : index
    %29 = vector.load %arg5[%c1_22, %c0_23] : memref<9x128xf32, #tpu.memory_space<vmem>>, vector<1x128xf32>
    %30 = vector.broadcast %29 : vector<1x128xf32> to vector<16x128xf32>
    %31 = arith.mulf %28, %30 : vector<16x128xf32>
    %32 = arith.addf %27, %31 : vector<16x128xf32>
    %c0_24 = arith.constant 0 : index
    %c256 = arith.constant 256 : index
    %33 = vector.load %arg10[%c0_24, %c256] : memref<18x384xf32, #tpu.memory_space<vmem>>, vector<16x128xf32>
    %c2 = arith.constant 2 : index
    %c0_25 = arith.constant 0 : index
    %34 = vector.load %arg5[%c2, %c0_25] : memref<9x128xf32, #tpu.memory_space<vmem>>, vector<1x128xf32>
    %35 = vector.broadcast %34 : vector<1x128xf32> to vector<16x128xf32>
    %36 = arith.mulf %33, %35 : vector<16x128xf32>
    %37 = arith.addf %32, %36 : vector<16x128xf32>
    %c1_26 = arith.constant 1 : index
    %c0_27 = arith.constant 0 : index
    %38 = vector.load %arg10[%c1_26, %c0_27] : memref<18x384xf32, #tpu.memory_space<vmem>>, vector<16x128xf32>
    %c3 = arith.constant 3 : index
    %c0_28 = arith.constant 0 : index
    %39 = vector.load %arg5[%c3, %c0_28] : memref<9x128xf32, #tpu.memory_space<vmem>>, vector<1x128xf32>
    %40 = vector.broadcast %39 : vector<1x128xf32> to vector<16x128xf32>
    %41 = arith.mulf %38, %40 : vector<16x128xf32>
    %42 = arith.addf %37, %41 : vector<16x128xf32>
    %c1_29 = arith.constant 1 : index
    %c128_30 = arith.constant 128 : index
    %43 = vector.load %arg10[%c1_29, %c128_30] : memref<18x384xf32, #tpu.memory_space<vmem>>, vector<16x128xf32>
    %c4 = arith.constant 4 : index
    %c0_31 = arith.constant 0 : index
    %44 = vector.load %arg5[%c4, %c0_31] : memref<9x128xf32, #tpu.memory_space<vmem>>, vector<1x128xf32>
    %45 = vector.broadcast %44 : vector<1x128xf32> to vector<16x128xf32>
    %46 = arith.mulf %43, %45 : vector<16x128xf32>
    %47 = arith.addf %42, %46 : vector<16x128xf32>
    %c1_32 = arith.constant 1 : index
    %c256_33 = arith.constant 256 : index
    %48 = vector.load %arg10[%c1_32, %c256_33] : memref<18x384xf32, #tpu.memory_space<vmem>>, vector<16x128xf32>
    %c5 = arith.constant 5 : index
    %c0_34 = arith.constant 0 : index
    %49 = vector.load %arg5[%c5, %c0_34] : memref<9x128xf32, #tpu.memory_space<vmem>>, vector<1x128xf32>
    %50 = vector.broadcast %49 : vector<1x128xf32> to vector<16x128xf32>
    %51 = arith.mulf %48, %50 : vector<16x128xf32>
    %52 = arith.addf %47, %51 : vector<16x128xf32>
    %c2_35 = arith.constant 2 : index
    %c0_36 = arith.constant 0 : index
    %53 = vector.load %arg10[%c2_35, %c0_36] : memref<18x384xf32, #tpu.memory_space<vmem>>, vector<16x128xf32>
    %c6 = arith.constant 6 : index
    %c0_37 = arith.constant 0 : index
    %54 = vector.load %arg5[%c6, %c0_37] : memref<9x128xf32, #tpu.memory_space<vmem>>, vector<1x128xf32>
    %55 = vector.broadcast %54 : vector<1x128xf32> to vector<16x128xf32>
    %56 = arith.mulf %53, %55 : vector<16x128xf32>
    %57 = arith.addf %52, %56 : vector<16x128xf32>
    %c2_38 = arith.constant 2 : index
    %c128_39 = arith.constant 128 : index
    %58 = vector.load %arg10[%c2_38, %c128_39] : memref<18x384xf32, #tpu.memory_space<vmem>>, vector<16x128xf32>
    %c7 = arith.constant 7 : index
    %c0_40 = arith.constant 0 : index
    %59 = vector.load %arg5[%c7, %c0_40] : memref<9x128xf32, #tpu.memory_space<vmem>>, vector<1x128xf32>
    %60 = vector.broadcast %59 : vector<1x128xf32> to vector<16x128xf32>
    %61 = arith.mulf %58, %60 : vector<16x128xf32>
    %62 = arith.addf %57, %61 : vector<16x128xf32>
    %c2_41 = arith.constant 2 : index
    %c256_42 = arith.constant 256 : index
    %63 = vector.load %arg10[%c2_41, %c256_42] : memref<18x384xf32, #tpu.memory_space<vmem>>, vector<16x128xf32>
    %c8 = arith.constant 8 : index
    %c0_43 = arith.constant 0 : index
    %64 = vector.load %arg5[%c8, %c0_43] : memref<9x128xf32, #tpu.memory_space<vmem>>, vector<1x128xf32>
    %65 = vector.broadcast %64 : vector<1x128xf32> to vector<16x128xf32>
    %66 = arith.mulf %63, %65 : vector<16x128xf32>
    %67 = arith.addf %62, %66 : vector<16x128xf32>
    %c0_44 = arith.constant 0 : index
    %c0_45 = arith.constant 0 : index
    %68 = vector.load %arg6[%c0_44, %c0_45] : memref<1x128xf32, #tpu.memory_space<vmem>>, vector<1x128xf32>
    %69 = vector.broadcast %68 : vector<1x128xf32> to vector<16x128xf32>
    %70 = arith.addf %67, %69 : vector<16x128xf32>
    %cst_46 = arith.constant 0.000000e+00 : f32
    %cst_47 = arith.constant 6.000000e+00 : f32
    %71 = vector.broadcast %cst_46 : f32 to vector<16x128xf32>
    %72 = arith.maximumf %71, %70 : vector<16x128xf32>
    %73 = vector.broadcast %cst_47 : f32 to vector<16x128xf32>
    %74 = arith.minimumf %73, %72 : vector<16x128xf32>
    %75 = arith.truncf %74 : vector<16x128xf32> to vector<16x128xbf16>
    %c0_48 = arith.constant 0 : index
    %c0_49 = arith.constant 0 : index
    %76 = vector.load %arg7[%c0_48, %c0_49] : memref<128x128xbf16, #tpu.memory_space<vmem>>, vector<128x128xbf16>
    %cst_50 = arith.constant dense<0.000000e+00> : vector<16x128xf32>
    %77 = tpu.matmul %75, %76, %cst_50 {dimension_numbers = #tpu.dot_dimension_numbers<[1], [0], [0], [1], [0, 0, 1, 1], [], []>} : vector<16x128xbf16>, vector<128x128xbf16>, vector<16x128xf32> -> vector<16x128xf32>
    %c0_51 = arith.constant 0 : index
    %c0_52 = arith.constant 0 : index
    %78 = vector.load %arg8[%c0_51, %c0_52] : memref<1x128xf32, #tpu.memory_space<vmem>>, vector<1x128xf32>
    %79 = vector.broadcast %78 : vector<1x128xf32> to vector<16x128xf32>
    %80 = arith.addf %77, %79 : vector<16x128xf32>
    %81 = arith.addf %80, %16 : vector<16x128xf32>
    %c0_53 = arith.constant 0 : index
    %c0_54 = arith.constant 0 : index
    %c0_55 = arith.constant 0 : index
    %82 = vector.load %arg9[%c0_53, %c0_54, %c0_55] : memref<1x16x128xf32, #tpu.memory_space<vmem>>, vector<1x16x128xf32>
    %83 = vector.shape_cast %82 : vector<1x16x128xf32> to vector<16x128xf32>
    %84 = vector.shape_cast %81 : vector<16x128xf32> to vector<1x16x128xf32>
    tpu.vector_store %arg9[%c0_53, %c0_54, %c0_55], %84 {strides = array<i32>} : memref<1x16x128xf32, #tpu.memory_space<vmem>>, vector<1x16x128xf32>,
    return
  }
  func.func @transform_0(%arg0: i32) -> (i32, i32, i32) {
    %c0_i32 = arith.constant 0 : i32
    %c0_i32_0 = arith.constant 0 : i32
    %c0_i32_1 = arith.constant 0 : i32
    return %arg0, %c0_i32, %c0_i32_0 : i32, i32, i32
  }
  func.func @transform_1(%arg0: i32) -> (i32, i32) {
    %c0_i32 = arith.constant 0 : i32
    %c0_i32_0 = arith.constant 0 : i32
    %c0_i32_1 = arith.constant 0 : i32
    return %c0_i32, %c0_i32_0 : i32, i32
  }
  func.func @transform_2(%arg0: i32) -> (i32, i32) {
    %c0_i32 = arith.constant 0 : i32
    %c0_i32_0 = arith.constant 0 : i32
    %c0_i32_1 = arith.constant 0 : i32
    return %c0_i32, %c0_i32_0 : i32, i32
  }
  func.func @transform_3(%arg0: i32) -> (i32, i32) {
    %c0_i32 = arith.constant 0 : i32
    %c0_i32_0 = arith.constant 0 : i32
    %c0_i32_1 = arith.constant 0 : i32
    return %c0_i32, %c0_i32_0 : i32, i32
  }
  func.func @transform_4(%arg0: i32) -> (i32, i32) {
    %c0_i32 = arith.constant 0 : i32
    %c0_i32_0 = arith.constant 0 : i32
    %c0_i32_1 = arith.constant 0 : i32
    return %c0_i32, %c0_i32_0 : i32, i32
  }
  func.func @transform_5(%arg0: i32) -> (i32, i32) {
    %c0_i32 = arith.constant 0 : i32
    %c0_i32_0 = arith.constant 0 : i32
    %c0_i32_1 = arith.constant 0 : i32
    return %c0_i32, %c0_i32_0 : i32, i32
  }
  func.func @transform_6(%arg0: i32) -> (i32, i32) {
    %c0_i32 = arith.constant 0 : i32
    %c0_i32_0 = arith.constant 0 : i32
    %c0_i32_1 = arith.constant 0 : i32
    return %c0_i32, %c0_i32_0 : i32, i32
  }
  func.func @transform_7(%arg0: i32) -> (i32, i32) {
    %c0_i32 = arith.constant 0 : i32
    %c0_i32_0 = arith.constant 0 : i32
    %c0_i32_1 = arith.constant 0 : i32
    return %c0_i32, %c0_i32_0 : i32, i32
  }
  func.func @transform_8(%arg0: i32) -> (i32, i32, i32) {
    %c0_i32 = arith.constant 0 : i32
    %c0_i32_0 = arith.constant 0 : i32
    %c0_i32_1 = arith.constant 0 : i32
    return %arg0, %c0_i32, %c0_i32_0 : i32, i32, i32
  }
}

</mosaic_0001>

<llo_original>
// kernel: tpu_custom_call.1
$region0: #{tpu_custom_call.1}
  #allocation0 [shape = 'u32[]', space=smem, size = 0x4, offset = 0x4, fixed_abs, tag = 'smem constant byte address 0x4 - core index']
  #allocation1 [shape = 'u32[144,128]{1,0:T(1,128)}', space=vmem, size = 0x12000, scoped, tag = 'internal scratch']
  #allocation2 [shape = 'f32[18,384]{1,0:T(8,128)}', space=vmem, size = 0x9000, scoped, tag = 'scratch operand']
  %s0 = inlined_call_operand.hbm [shape: f32[2,16,64], index: 0, kind: input, shape index: {}]
  %s1 = inlined_call_operand.hbm [shape: bf16[64,512], index: 1, kind: input, shape index: {}]
  %s2 = inlined_call_operand.vmem [shape: f32[1,384], index: 2, kind: input, shape index: {}]
  %s3 = inlined_call_operand.vmem [shape: f32[1,128], index: 3, kind: input, shape index: {}]
  %s4 = inlined_call_operand.hbm [shape: f32[9,128], index: 4, kind: input, shape index: {}]
  %s5 = inlined_call_operand.vmem [shape: f32[1,128], index: 5, kind: input, shape index: {}]
  %s6 = inlined_call_operand.hbm [shape: bf16[128,128], index: 6, kind: input, shape index: {}]
  %s7 = inlined_call_operand.vmem [shape: f32[1,128], index: 7, kind: input, shape index: {}]
  %s8 = inlined_call_operand.hbm [shape: f32[2,16,128], index: 8, kind: output, shape index: {}]
  %s9 = sld [smem:[#allocation0]]
  $region81: #{tpu_custom_call.1} parent=0
    _
  %s11 = ssub.s32 1, %s9
  %s12 = scalar_select 0, %s11, %s9
  $region1: #{tpu_custom_call.1} parent=0
    #allocation3 [shape = 'u8[16384]{0}', space=vmem, size = 0x4000, scoped, tag = 'input window, operand 0']
    #allocation4 [shape = 's32[2]{0}', space=sflag, size = 0x8, scoped, tag = 'scoped memory for tpu_custom_call.1']
    #allocation5 [shape = 's32[2]{0}', space=sflag, size = 0x8, scoped, tag = 'scoped memory for tpu_custom_call.1']
    #allocation6 [shape = 'u8[65536]{0}', space=vmem, size = 0x10000, scoped, tag = 'input window, operand 1, single buffered']
    #allocation7 [shape = 's32[1]{0}', space=sflag, size = 0x4, scoped, tag = 'scoped memory for tpu_custom_call.1']
    #allocation8 [shape = 'u8[8192]{0}', space=vmem, size = 0x2000, scoped, tag = 'input window, operand 4, single buffered']
    #allocation9 [shape = 'u8[32768]{0}', space=vmem, size = 0x8000, scoped, tag = 'input window, operand 6, single buffered']
    #allocation10 [shape = 's32[1]{0}', space=sflag, size = 0x4, scoped, tag = 'scoped memory for tpu_custom_call.1']
    #allocation11 [shape = 'u8[16384]{0}', space=vmem, size = 0x4000, scoped, tag = 'output window, operand 0']
    %13 = vsyncpa [#allocation4], 0
    %s14 = scalar_lea.sflag [#allocation4], 1
    %15 = vsyncpa %s14, 0
    %16 = vsyncpa [#allocation7], 0
    %17 = vsyncpa [#allocation10], 0
    %18 = vsyncpa [#allocation5], 0
    %s19 = scalar_lea.sflag [#allocation5], 1
    %20 = vsyncpa %s19, 0
    loop: start=0, step=1, limit=4
    $region2: #{tpu_custom_call.1} parent=1 // loop_pre_header
      _
    $region3: #{tpu_custom_call.1} parent=1 // loop_header
      %s22 = sphi 0, %s26
      %p23 = scmp.ge.s32.totalorder %s22, 4
      %s32 = sphi 0, %s34
      %s35 = sphi 0, %s32
      %s36 = sphi 0, %s35
      %s52 = sphi 0, %s36
      %s56 = sphi 0, %s56
      %s58 = sphi 0, %s56
      %s59 = sphi 0, %s58
      %s73 = sphi 0, %s59
      %s77 = sphi 0, %s77
      %s79 = sphi 0, %s77
      %s80 = sphi 0, %s79
      %s94 = sphi 0, %s80
      %s98 = sphi 0, %s98
      %s100 = sphi 0, %s98
      %s101 = sphi 0, %s100
      %s115 = sphi 0, %s101
      %s119 = sphi 0, %s119
      %s121 = sphi 0, %s119
      %s122 = sphi 0, %s121
      %s136 = sphi 0, %s122
      %s140 = sphi 0, %s140
      %s142 = sphi 0, %s140
      %s143 = sphi 0, %s142
      %s157 = sphi 0, %s143
      %s161 = sphi 0, %s161
      %s163 = sphi 0, %s161
      %s164 = sphi 0, %s163
      %s178 = sphi 0, %s164
      %s182 = sphi 0, %s182
      %s184 = sphi 0, %s182
      %s185 = sphi 0, %s184
      %s199 = sphi 0, %s185
      %s205 = sphi 0, %s207
      %s208 = sphi 0, %s205
      %s209 = sphi 0, %s208
      %s225 = sphi 0, %s209
    $region4: #{tpu_custom_call.1} parent=1 // loop_header_branch
      %25 = sbr.rel (%p23) target = $region8
    $region5: #{tpu_custom_call.1} parent=1 // loop_body
      %s27 = ssub.s32 %s22, 1
      %s28 = ssub.s32 %s22, 2
      %s29 = sadd.s32 %s22, 1
      %s30 = ssub.s32 %s22, %s29
      %p31 = scmp.eq.s32.totalorder %s30, 0
      %s33 = sadd.s32 %s32, 1
      %s34 = scalar_select %p31, %s32, %s33
      %p37 = pneg %p31
      %p38 = scmp.eq.s32.totalorder %s22, 1
      %p39 = por %p37, %p38
      %p40 = scmp.ne.s32.totalorder %s32, %s35
      %p41 = scmp.eq.s32.totalorder %s22, 0
      %p42 = por %p40, %p41
      %p43 = scmp.ne.s32.totalorder %s32, %s35
      %p44 = scmp.eq.s32.totalorder %s27, 1
      %p45 = por %p43, %p44
      %p46 = scmp.ne.s32.totalorder %s35, %s36
      %p47 = scmp.eq.s32.totalorder %s27, 0
      %p48 = por %p46, %p47
      %p49 = scmp.ne.s32.totalorder %s35, %s36
      %p50 = scmp.eq.s32.totalorder %s28, 1
      %p51 = por %p49, %p50
      %p53 = scmp.ne.s32.totalorder %s36, %s52
      %p54 = scmp.eq.s32.totalorder %s28, 0
      %p55 = por %p53, %p54
      %s57 = sadd.s32 %s56, 1
      %p60 = scmp.eq.s32.totalorder %s22, 1
      %p61 = scmp.ne.s32.totalorder %s56, %s58
      %p62 = scmp.eq.s32.totalorder %s22, 0
      %p63 = por %p61, %p62
      %p64 = scmp.ne.s32.totalorder %s56, %s58
      %p65 = scmp.eq.s32.totalorder %s27, 1
      %p66 = por %p64, %p65
      %p67 = scmp.ne.s32.totalorder %s58, %s59
      %p68 = scmp.eq.s32.totalorder %s27, 0
      %p69 = por %p67, %p68
      %p70 = scmp.ne.s32.totalorder %s58, %s59
      %p71 = scmp.eq.s32.totalorder %s28, 1
      %p72 = por %p70, %p71
      %p74 = scmp.ne.s32.totalorder %s59, %s73
      %p75 = scmp.eq.s32.totalorder %s28, 0
      %p76 = por %p74, %p75
      %s78 = sadd.s32 %s77, 1
      %p81 = scmp.eq.s32.totalorder %s22, 1
      %p82 = scmp.ne.s32.totalorder %s77, %s79
      %p83 = scmp.eq.s32.totalorder %s22, 0
      %p84 = por %p82, %p83
      %p85 = scmp.ne.s32.totalorder %s77, %s79
      %p86 = scmp.eq.s32.totalorder %s27, 1
      %p87 = por %p85, %p86
      %p88 = scmp.ne.s32.totalorder %s79, %s80
      %p89 = scmp.eq.s32.totalorder %s27, 0
      %p90 = por %p88, %p89
      %p91 = scmp.ne.s32.totalorder %s79, %s80
      %p92 = scmp.eq.s32.totalorder %s28, 1
      %p93 = por %p91, %p92
      %p95 = scmp.ne.s32.totalorder %s80, %s94
      %p96 = scmp.eq.s32.totalorder %s28, 0
      %p97 = por %p95, %p96
      %s99 = sadd.s32 %s98, 1
      %p102 = scmp.eq.s32.totalorder %s22, 1
      %p103 = scmp.ne.s32.totalorder %s98, %s100
      %p104 = scmp.eq.s32.totalorder %s22, 0
      %p105 = por %p103, %p104
      %p106 = scmp.ne.s32.totalorder %s98, %s100
      %p107 = scmp.eq.s32.totalorder %s27, 1
      %p108 = por %p106, %p107
      %p109 = scmp.ne.s32.totalorder %s100, %s101
      %p110 = scmp.eq.s32.totalorder %s27, 0
      %p111 = por %p109, %p110
      %p112 = scmp.ne.s32.totalorder %s100, %s101
      %p113 = scmp.eq.s32.totalorder %s28, 1
      %p114 = por %p112, %p113
      %p116 = scmp.ne.s32.totalorder %s101, %s115
      %p117 = scmp.eq.s32.totalorder %s28, 0
      %p118 = por %p116, %p117
      %s120 = sadd.s32 %s119, 1
      %p123 = scmp.eq.s32.totalorder %s22, 1
      %p124 = scmp.ne.s32.totalorder %s119, %s121
      %p125 = scmp.eq.s32.totalorder %s22, 0
      %p126 = por %p124, %p125
      %p127 = scmp.ne.s32.totalorder %s119, %s121
      %p128 = scmp.eq.s32.totalorder %s27, 1
      %p129 = por %p127, %p128
      %p130 = scmp.ne.s32.totalorder %s121, %s122
      %p131 = scmp.eq.s32.totalorder %s27, 0
      %p132 = por %p130, %p131
      %p133 = scmp.ne.s32.totalorder %s121, %s122
      %p134 = scmp.eq.s32.totalorder %s28, 1
      %p135 = por %p133, %p134
      %p137 = scmp.ne.s32.totalorder %s122, %s136
      %p138 = scmp.eq.s32.totalorder %s28, 0
      %p139 = por %p137, %p138
      %s141 = sadd.s32 %s140, 1
      %p144 = scmp.eq.s32.totalorder %s22, 1
      %p145 = scmp.ne.s32.totalorder %s140, %s142
      %p146 = scmp.eq.s32.totalorder %s22, 0
      %p147 = por %p145, %p146
      %p148 = scmp.ne.s32.totalorder %s140, %s142
      %p149 = scmp.eq.s32.totalorder %s27, 1
      %p150 = por %p148, %p149
      %p151 = scmp.ne.s32.totalorder %s142, %s143
      %p152 = scmp.eq.s32.totalorder %s27, 0
      %p153 = por %p151, %p152
      %p154 = scmp.ne.s32.totalorder %s142, %s143
      %p155 = scmp.eq.s32.totalorder %s28, 1
      %p156 = por %p154, %p155
      %p158 = scmp.ne.s32.totalorder %s143, %s157
      %p159 = scmp.eq.s32.totalorder %s28, 0
      %p160 = por %p158, %p159
      %s162 = sadd.s32 %s161, 1
      %p165 = scmp.eq.s32.totalorder %s22, 1
      %p166 = scmp.ne.s32.totalorder %s161, %s163
      %p167 = scmp.eq.s32.totalorder %s22, 0
      %p168 = por %p166, %p167
      %p169 = scmp.ne.s32.totalorder %s161, %s163
      %p170 = scmp.eq.s32.totalorder %s27, 1
      %p171 = por %p169, %p170
      %p172 = scmp.ne.s32.totalorder %s163, %s164
      %p173 = scmp.eq.s32.totalorder %s27, 0
      %p174 = por %p172, %p173
      %p175 = scmp.ne.s32.totalorder %s163, %s164
      %p176 = scmp.eq.s32.totalorder %s28, 1
      %p177 = por %p175, %p176
      %p179 = scmp.ne.s32.totalorder %s164, %s178
      %p180 = scmp.eq.s32.totalorder %s28, 0
      %p181 = por %p179, %p180
      %s183 = sadd.s32 %s182, 1
      %p186 = scmp.eq.s32.totalorder %s22, 1
      %p187 = scmp.ne.s32.totalorder %s182, %s184
      %p188 = scmp.eq.s32.totalorder %s22, 0
      %p189 = por %p187, %p188
      %p190 = scmp.ne.s32.totalorder %s182, %s184
      %p191 = scmp.eq.s32.totalorder %s27, 1
      %p192 = por %p190, %p191
      %p193 = scmp.ne.s32.totalorder %s184, %s185
      %p194 = scmp.eq.s32.totalorder %s27, 0
      %p195 = por %p193, %p194
      %p196 = scmp.ne.s32.totalorder %s184, %s185
      %p197 = scmp.eq.s32.totalorder %s28, 1
      %p198 = por %p196, %p197
      %p200 = scmp.ne.s32.totalorder %s185, %s199
      %p201 = scmp.eq.s32.totalorder %s28, 0
      %p202 = por %p200, %p201
      %s203 = ssub.s32 %s22, %s29
      %p204 = scmp.eq.s32.totalorder %s203, 0
      %s206 = sadd.s32 %s205, 1
      %s207 = scalar_select %p204, %s205, %s206
      %p210 = pneg %p204
      %p211 = scmp.eq.s32.totalorder %s22, 1
      %p212 = por %p210, %p211
      %p213 = scmp.ne.s32.totalorder %s205, %s208
      %p214 = scmp.eq.s32.totalorder %s22, 0
      %p215 = por %p213, %p214
      %p216 = scmp.ne.s32.totalorder %s205, %s208
      %p217 = scmp.eq.s32.totalorder %s27, 1
      %p218 = por %p216, %p217
      %p219 = scmp.ne.s32.totalorder %s208, %s209
      %p220 = scmp.eq.s32.totalorder %s27, 0
      %p221 = por %p219, %p220
      %p222 = scmp.ne.s32.totalorder %s208, %s209
      %p223 = scmp.eq.s32.totalorder %s28, 1
      %p224 = por %p222, %p223
      %p226 = scmp.ne.s32.totalorder %s209, %s225
      %p227 = scmp.eq.s32.totalorder %s28, 0
      %p228 = por %p226, %p227
      %p229 = scmp.le.s32.totalorder 1, %s22
      %p230 = scmp.lt.s32.totalorder %s22, 3
      %p231 = pnand %p229, %p230
      %p232 = pneg %p231
      // Predicated region
      $region9: #{tpu_custom_call.1} parent=5 // pred_check
        _
      $region10: #{tpu_custom_call.1} parent=5 // pred_check_branch
        %234 = sbr.rel (%p231) target = $region12
      $region11: #{tpu_custom_call.1} parent=5 // pred_region
        %s235 = ssub.s32 %s22, 1
        // Predicated region
        $region13: #{tpu_custom_call.1} parent=11 // pred_check
          %p236 = pneg %p69
        $region14: #{tpu_custom_call.1} parent=11 // pred_check_branch
          %238 = sbr.rel (%p236) target = $region16
        $region15: #{tpu_custom_call.1} parent=11 // pred_region
          %s240 = ssub.s32 2048, 2048
          %241 = vsyncadd [#allocation7], %s240
          %s242 = sshll.u32 [#allocation6], 4
          %s243 = int_to_ptr.vmem [resolvable:$true] %s242
          %248 = dma.hbm_to_vmem [thread:$0]  %s1, 2048, %s243, [#allocation7], 256, 256, 16
        $region16: #{tpu_custom_call.1} parent=11 // pred_fallthru
          _
        // Predicated region
        $region17: #{tpu_custom_call.1} parent=11 // pred_check
          %p249 = pneg %p90
        $region18: #{tpu_custom_call.1} parent=11 // pred_check_branch
          %251 = sbr.rel (%p249) target = $region20
        $region19: #{tpu_custom_call.1} parent=11 // pred_region
          _
        $region20: #{tpu_custom_call.1} parent=11 // pred_fallthru
          _
        // Predicated region
        $region21: #{tpu_custom_call.1} parent=11 // pred_check
          %p252 = pneg %p111
        $region22: #{tpu_custom_call.1} parent=11 // pred_check_branch
          %254 = sbr.rel (%p252) target = $region24
        $region23: #{tpu_custom_call.1} parent=11 // pred_region
          _
        $region24: #{tpu_custom_call.1} parent=11 // pred_fallthru
          _
        // Predicated region
        $region25: #{tpu_custom_call.1} parent=11 // pred_check
          %p255 = pneg %p132
        $region26: #{tpu_custom_call.1} parent=11 // pred_check_branch
          %257 = sbr.rel (%p255) target = $region28
        $region27: #{tpu_custom_call.1} parent=11 // pred_region
          %s259 = ssub.s32 256, 256
          %260 = vsyncadd [#allocation7], %s259
          %s261 = sshll.u32 [#allocation8], 4
          %s262 = int_to_ptr.vmem [resolvable:$true] %s261
          %267 = dma.hbm_to_vmem [thread:$0]  %s4, 256, %s262, [#allocation7], 128, 128, 8
        $region28: #{tpu_custom_call.1} parent=11 // pred_fallthru
          _
        // Predicated region
        $region29: #{tpu_custom_call.1} parent=11 // pred_check
          %p268 = pneg %p153
        $region30: #{tpu_custom_call.1} parent=11 // pred_check_branch
          %270 = sbr.rel (%p268) target = $region32
        $region31: #{tpu_custom_call.1} parent=11 // pred_region
          _
        $region32: #{tpu_custom_call.1} parent=11 // pred_fallthru
          _
        // Predicated region
        $region33: #{tpu_custom_call.1} parent=11 // pred_check
          %p271 = pneg %p174
        $region34: #{tpu_custom_call.1} parent=11 // pred_check_branch
          %273 = sbr.rel (%p271) target = $region36
        $region35: #{tpu_custom_call.1} parent=11 // pred_region
          %s275 = ssub.s32 1024, 1024
          %276 = vsyncadd [#allocation10], %s275
          %s277 = sshll.u32 [#allocation9], 4
          %s278 = int_to_ptr.vmem [resolvable:$true] %s277
          %283 = dma.hbm_to_vmem [thread:$0]  %s6, 1024, %s278, [#allocation10], 64, 64, 4
        $region36: #{tpu_custom_call.1} parent=11 // pred_fallthru
          _
        // Predicated region
        $region37: #{tpu_custom_call.1} parent=11 // pred_check
          %p284 = pneg %p195
        $region38: #{tpu_custom_call.1} parent=11 // pred_check_branch
          %286 = sbr.rel (%p284) target = $region40
        $region39: #{tpu_custom_call.1} parent=11 // pred_region
          _
        $region40: #{tpu_custom_call.1} parent=11 // pred_fallthru
          _
      $region12: #{tpu_custom_call.1} parent=5 // pred_fallthru
        _
      %p287 = scmp.lt.s32.totalorder %s22, 2
      // Predicated region
      $region41: #{tpu_custom_call.1} parent=5 // pred_check
        %p288 = pneg %p287
      $region42: #{tpu_custom_call.1} parent=5 // pred_check_branch
        %290 = sbr.rel (%p288) target = $region44
      $region43: #{tpu_custom_call.1} parent=5 // pred_region
        // Predicated region
        $region45: #{tpu_custom_call.1} parent=43 // pred_check
          %p291 = pneg %p42
        $region46: #{tpu_custom_call.1} parent=43 // pred_check_branch
          %293 = sbr.rel (%p291) target = $region48
        $region47: #{tpu_custom_call.1} parent=43 // pred_region
          %s294 = sand.u32 %s32, 1
          %s295 = scalar_lea.sflag [#allocation4], %s294
          %s296 = sand.u32 %s32, 1
          %s297 = smul.addr %s296, 16
          %s298 = scalar_lea.vmem [#allocation3], %s297
          %s300 = ssub.s32 256, 256
          %301 = vsyncadd %s295, %s300
          %s302 = smul.addr %s22, 2
          %s303 = smul.addr %s302, 128
          %s304 = scalar_lea.hbm %s0, %s303
          %s305 = sshll.u32 %s298, 4
          %s306 = int_to_ptr.vmem [resolvable:$true] %s305
          %311 = dma.hbm_to_vmem [thread:$0]  %s304, 256, %s306, %s295, 128, 128, 8
        $region48: #{tpu_custom_call.1} parent=43 // pred_fallthru
          _
      $region44: #{tpu_custom_call.1} parent=5 // pred_fallthru
        _
      %p312 = scmp.le.s32.totalorder 1, %s22
      %p313 = scmp.lt.s32.totalorder %s22, 3
      %p314 = pnand %p312, %p313
      %p315 = pneg %p314
      // Predicated region
      $region49: #{tpu_custom_call.1} parent=5 // pred_check
        _
      $region50: #{tpu_custom_call.1} parent=5 // pred_check_branch
        %317 = sbr.rel (%p314) target = $region52
      $region51: #{tpu_custom_call.1} parent=5 // pred_region
        %s318 = ssub.s32 %s22, 1
        %s319 = sand.u32 %s35, 1
        %s320 = scalar_lea.sflag [#allocation4], %s319
        %s321 = sand.u32 %s35, 1
        %s322 = smul.addr %s321, 16
        %s323 = scalar_lea.vmem [#allocation3], %s322
        // Predicated region
        $region53: #{tpu_custom_call.1} parent=51 // pred_check
          %p324 = pneg %p48
        $region54: #{tpu_custom_call.1} parent=51 // pred_check_branch
          %326 = sbr.rel (%p324) target = $region56
        $region55: #{tpu_custom_call.1} parent=51 // pred_region
          %327 = dma.done %s320, 256
        $region56: #{tpu_custom_call.1} parent=51 // pred_fallthru
          _
        // Predicated region
        $region57: #{tpu_custom_call.1} parent=51 // pred_check
          %p328 = pneg %p69
        $region58: #{tpu_custom_call.1} parent=51 // pred_check_branch
          %330 = sbr.rel (%p328) target = $region60
        $region59: #{tpu_custom_call.1} parent=51 // pred_region
          %331 = dma.done [#allocation7], 2048
        $region60: #{tpu_custom_call.1} parent=51 // pred_fallthru
          _
        // Predicated region
        $region61: #{tpu_custom_call.1} parent=51 // pred_check
          %p332 = pneg %p132
        $region62: #{tpu_custom_call.1} parent=51 // pred_check_branch
          %334 = sbr.rel (%p332) target = $region64
        $region63: #{tpu_custom_call.1} parent=51 // pred_region
          %335 = dma.done [#allocation7], 256
        $region64: #{tpu_custom_call.1} parent=51 // pred_fallthru
          _
        // Predicated region
        $region65: #{tpu_custom_call.1} parent=51 // pred_check
          %p336 = pneg %p174
        $region66: #{tpu_custom_call.1} parent=51 // pred_check_branch
          %338 = sbr.rel (%p336) target = $region68
        $region67: #{tpu_custom_call.1} parent=51 // pred_region
          %339 = dma.done [#allocation10], 1024
        $region68: #{tpu_custom_call.1} parent=51 // pred_fallthru
          _
        %s340 = sand.u32 %s35, 1
        %s341 = scalar_lea.sflag [#allocation4], %s340
        %s342 = sand.u32 %s35, 1
        %s343 = smul.addr %s342, 16
        %s344 = scalar_lea.vmem [#allocation3], %s343
        %p345 = pneg %p48
        %p346 = pneg %p45
        %p347 = pneg %p69
        %p348 = pneg %p66
        %p349 = pneg %p90
        %p350 = pneg %p87
        %p351 = pneg %p111
        %p352 = pneg %p108
        %p353 = pneg %p132
        %p354 = pneg %p129
        %p355 = pneg %p153
        %p356 = pneg %p150
        %p357 = pneg %p174
        %p358 = pneg %p171
        %p359 = pneg %p195
        %p360 = pneg %p192
        %p361 = pneg %p221
        %p362 = pneg %p218
        %s363 = sand.u32 %s208, 1
        %s364 = scalar_lea.sflag [#allocation5], %s363
        %s365 = sand.u32 %s208, 1
        %s366 = smul.addr %s365, 16
        %s367 = scalar_lea.vmem [#allocation11], %s366
        %v369 = vld [vmem:[%s323] sm:$0xff]
        %v370 = vld [vmem:[%s323 + $0x8] sm:$0xff]
        %v371 = vpack.c.bf16 %v370, %v369
        %v372 = vld [vmem:[#allocation6] sm:$0xff]
        %v373 = vld [vmem:[#allocation6 + $0x8] sm:$0xff]
        %v374 = vld [vmem:[#allocation6 + $0x10] sm:$0xff]
        %v375 = vld [vmem:[#allocation6 + $0x18] sm:$0xff]
        %v376 = vld [vmem:[#allocation6 + $0x20] sm:$0xff]
        %v377 = vld [vmem:[#allocation6 + $0x28] sm:$0xff]
        %v378 = vld [vmem:[#allocation6 + $0x30] sm:$0xff]
        %v379 = vld [vmem:[#allocation6 + $0x38] sm:$0xff]
        %v380 = vld [vmem:[#allocation6 + $0x40] sm:$0xff]
        %v381 = vld [vmem:[#allocation6 + $0x48] sm:$0xff]
        %v382 = vld [vmem:[#allocation6 + $0x50] sm:$0xff]
        %v383 = vld [vmem:[#allocation6 + $0x58] sm:$0xff]
        %v384 = vld [vmem:[#allocation6 + $0x60] sm:$0xff]
        %v385 = vld [vmem:[#allocation6 + $0x68] sm:$0xff]
        %v386 = vld [vmem:[#allocation6 + $0x70] sm:$0xff]
        %v387 = vld [vmem:[#allocation6 + $0x78] sm:$0xff]
        %v404 = vunpack.c.l.b16 %v372
        %v405 = vunpack.c.h.b16 %v372
        %v406 = vunpack.c.l.b16 %v373
        %v407 = vunpack.c.h.b16 %v373
        %v408 = vunpack.c.l.b16 %v374
        %v409 = vunpack.c.h.b16 %v374
        %v410 = vunpack.c.l.b16 %v375
        %v411 = vunpack.c.h.b16 %v375
        %v412 = vunpack.c.l.b16 %v376
        %v413 = vunpack.c.h.b16 %v376
        %v414 = vunpack.c.l.b16 %v377
        %v415 = vunpack.c.h.b16 %v377
        %v416 = vunpack.c.l.b16 %v378
        %v417 = vunpack.c.h.b16 %v378
        %v418 = vunpack.c.l.b16 %v379
        %v419 = vunpack.c.h.b16 %v379
        %v420 = vunpack.c.l.b16 %v380
        %v421 = vunpack.c.h.b16 %v380
        %v422 = vunpack.c.l.b16 %v381
        %v423 = vunpack.c.h.b16 %v381
        %v424 = vunpack.c.l.b16 %v382
        %v425 = vunpack.c.h.b16 %v382
        %v426 = vunpack.c.l.b16 %v383
        %v427 = vunpack.c.h.b16 %v383
        %v428 = vunpack.c.l.b16 %v384
        %v429 = vunpack.c.h.b16 %v384
        %v430 = vunpack.c.l.b16 %v385
        %v431 = vunpack.c.h.b16 %v385
        %v432 = vunpack.c.l.b16 %v386
        %v433 = vunpack.c.h.b16 %v386
        %v434 = vunpack.c.l.b16 %v387
        %v435 = vunpack.c.h.b16 %v387
        %v436 = vpack.c.b16 %v408, %v404
        %v437 = vpack.c.b16 %v409, %v405
        %v438 = vpack.c.b16 %v410, %v406
        %v439 = vpack.c.b16 %v411, %v407
        %v440 = vpack.c.b16 %v416, %v412
        %v441 = vpack.c.b16 %v417, %v413
        %v442 = vpack.c.b16 %v418, %v414
        %v443 = vpack.c.b16 %v419, %v415
        %v444 = vpack.c.b16 %v424, %v420
        %v445 = vpack.c.b16 %v425, %v421
        %v446 = vpack.c.b16 %v426, %v422
        %v447 = vpack.c.b16 %v427, %v423
        %v448 = vpack.c.b16 %v432, %v428
        %v449 = vpack.c.b16 %v433, %v429
        %v450 = vpack.c.b16 %v434, %v430
        %v451 = vpack.c.b16 %v435, %v431
        %vm468 = vcmask 523264
        %v470 = vsel %vm468, %v371, 0
        %472 = vmatprep.subr.bf16.mxu0 %v437
        %473 = vmatpush1.bf16.msra.mxu0 %v436
        %474 = vmatprep.subr.bf16.mxu0 %v441
        %475 = vmatpush1.bf16.msra.mxu0 %v440
        %476 = vmatprep.subr.bf16.mxu0 %v445
        %477 = vmatpush1.bf16.msra.mxu0 %v444
        %478 = vmatprep.subr.bf16.mxu0 %v449
        %479 = vmatpush1.bf16.msra.mxu0 %v448
        %480 = vmatprep.subr.bf16.mxu0 0
        %481 = vmatpush1.bf16.msra.mxu0 0
        %482 = vmatprep.subr.bf16.mxu0 0
        %483 = vmatpush1.bf16.msra.mxu0 0
        %484 = vmatprep.subr.bf16.mxu0 0
        %485 = vmatpush1.bf16.msra.mxu0 0
        %486 = vmatprep.subr.bf16.mxu0 0
        %487 = vmatpush1.bf16.msra.mxu0 0
        %488 = vmatprep.subr.bf16.mxu0 0
        %489 = vmatpush1.bf16.msra.mxu0 0
        %490 = vmatprep.subr.bf16.mxu0 0
        %491 = vmatpush1.bf16.msra.mxu0 0
        %492 = vmatprep.subr.bf16.mxu0 0
        %493 = vmatpush1.bf16.msra.mxu0 0
        %494 = vmatprep.subr.bf16.mxu0 0
        %495 = vmatpush1.bf16.msra.mxu0 0
        %496 = vmatprep.subr.bf16.mxu0 0
        %497 = vmatpush1.bf16.msra.mxu0 0
        %498 = vmatprep.subr.bf16.mxu0 0
        %499 = vmatpush1.bf16.msra.mxu0 0
        %500 = vmatprep.subr.bf16.mxu0 0
        %501 = vmatpush1.bf16.msra.mxu0 0
        %502 = vmatprep.subr.bf16.mxu0 0
        %503 = vmatpush1.bf16.msra.mxu0 0
        %504 = vmatprep.mubr.bf16.mxu0 0
        %505 = vmatmul.mubr.bf16.gmra.mrb[0].mxu0 %v470
        %v506 = vpop.f32.mrb[0].mxu0
        %v507 = vadd.f32 0.0, %v506
        %v508 = vpop.f32.mrb[0].mxu0
        %v509 = vadd.f32 0.0, %v508
        %v510 = vpop.f32.mrb[0].mxu0
        %v511 = vadd.f32 0.0, %v510
        %v512 = vpop.f32.mrb[0].mxu0
        %v513 = vadd.f32 0.0, %v512
        %514 = vdwg.mxu0
        %515 = vmatprep.subr.bf16.mxu0 %v439
        %516 = vmatpush1.bf16.msra.mxu0 %v438
        %517 = vmatprep.subr.bf16.mxu0 %v443
        %518 = vmatpush1.bf16.msra.mxu0 %v442
        %519 = vmatprep.subr.bf16.mxu0 %v447
        %520 = vmatpush1.bf16.msra.mxu0 %v446
        %521 = vmatprep.subr.bf16.mxu0 %v451
        %522 = vmatpush1.bf16.msra.mxu0 %v450
        %523 = vmatprep.subr.bf16.mxu0 0
        %524 = vmatpush1.bf16.msra.mxu0 0
        %525 = vmatprep.subr.bf16.mxu0 0
        %526 = vmatpush1.bf16.msra.mxu0 0
        %527 = vmatprep.subr.bf16.mxu0 0
        %528 = vmatpush1.bf16.msra.mxu0 0
        %529 = vmatprep.subr.bf16.mxu0 0
        %530 = vmatpush1.bf16.msra.mxu0 0
        %531 = vmatprep.subr.bf16.mxu0 0
        %532 = vmatpush1.bf16.msra.mxu0 0
        %533 = vmatprep.subr.bf16.mxu0 0
        %534 = vmatpush1.bf16.msra.mxu0 0
        %535 = vmatprep.subr.bf16.mxu0 0
        %536 = vmatpush1.bf16.msra.mxu0 0
        %537 = vmatprep.subr.bf16.mxu0 0
        %538 = vmatpush1.bf16.msra.mxu0 0
        %539 = vmatprep.subr.bf16.mxu0 0
        %540 = vmatpush1.bf16.msra.mxu0 0
        %541 = vmatprep.subr.bf16.mxu0 0
        %542 = vmatpush1.bf16.msra.mxu0 0
        %543 = vmatprep.subr.bf16.mxu0 0
        %544 = vmatpush1.bf16.msra.mxu0 0
        %545 = vmatprep.subr.bf16.mxu0 0
        %546 = vmatpush1.bf16.msra.mxu0 0
        %547 = vmatprep.mubr.bf16.mxu0 0
        %548 = vmatmul.mubr.bf16.gmra.mrb[0].mxu0 %v470
        %v549 = vpop.f32.mrb[0].mxu0
        %v550 = vadd.f32 0.0, %v549
        %v551 = vpop.f32.mrb[0].mxu0
        %v552 = vadd.f32 0.0, %v551
        %v553 = vpop.f32.mrb[0].mxu0
        %v554 = vadd.f32 0.0, %v553
        %v555 = vpop.f32.mrb[0].mxu0
        %v556 = vadd.f32 0.0, %v555
        %557 = vdwg.mxu0
        %v558 = vld [vmem:[%s2] sm:$0x7]
        %v560 = vlaneseq
        %v561 = vshrl.u32 %v560, 7
        %v562 = vsub.s32 0, %v561
        %v563 = vrot.slane %v558, %v562
        %v564 = vlaneseq
        %v565 = vshrl.u32 %v564, 7
        %v566 = vsub.s32 1, %v565
        %v567 = vrot.slane %v558, %v566
        %v568 = vlaneseq
        %v569 = vshrl.u32 %v568, 7
        %v570 = vsub.s32 2, %v569
        %v571 = vrot.slane %v558, %v570
        %v575 = vadd.f32 %v507, %v563
        %v576 = vadd.f32 %v509, %v567
        %v577 = vadd.f32 %v550, %v571
        %v578 = vadd.f32 %v511, %v563
        %v579 = vadd.f32 %v513, %v567
        %v580 = vadd.f32 %v554, %v571
        %v581 = vmax.f32 %v575, 0.0
        %v582 = vmax.f32 %v576, 0.0
        %v583 = vmax.f32 %v577, 0.0
        %v584 = vmax.f32 %v578, 0.0
        %v585 = vmax.f32 %v579, 0.0
        %v586 = vmax.f32 %v580, 0.0
        %v587 = vmin.f32 %v581, 6.0
        %v588 = vmin.f32 %v582, 6.0
        %v589 = vmin.f32 %v583, 6.0
        %v590 = vmin.f32 %v584, 6.0
        %v591 = vmin.f32 %v585, 6.0
        %v592 = vmin.f32 %v586, 6.0
        %v593 = vld [vmem:[%s3] sm:$0x1]
        %v595 = vlaneseq
        %v596 = vshrl.u32 %v595, 7
        %v597 = vsub.s32 0, %v596
        %v598 = vrot.slane %v593, %v597
        %v600 = vadd.f32 %v552, %v598
        %v601 = vadd.f32 %v556, %v598
        %v602 = vlaneseq
        %vm603 = vcmp.ge.s32.totalorder %v602, 0
        %vm604 = vcmp.lt.s32.totalorder %v602, 384
        %vm605 = vmand %vm603, %vm604
        %606 = vst.msk [vmem:[#allocation2] ss:$8 sm:$0x7] %vm605, 0.0
        %607 = vst.msk [vmem:[#allocation2] ss:$8 sm:$0x0] %vm605, 0.0
        %s608 = scalar_lea.vmem [#allocation2], 49
        %609 = vst.msk [vmem:[%s608] ss:$8 sm:$0x7] %vm605, 0.0
        %610 = vst.msk [vmem:[%s608] ss:$8 sm:$0x0] %vm605, 0.0
        %vm617 = vcmask 1040384
        %v618 = vrot.slane %v587, 7
        %v619 = vrot.slane %v588, 7
        %v620 = vrot.slane %v589, 7
        %v621 = vrot.slane %v590, 7
        %v622 = vsel %vm617, %v618, %v621
        %v623 = vrot.slane %v591, 7
        %v624 = vsel %vm617, %v619, %v623
        %v625 = vrot.slane %v592, 7
        %v626 = vsel %vm617, %v620, %v625
        %636 = vst [vmem:[#allocation2] sm:$0xfe] %v618
        %637 = vst [vmem:[#allocation2 + $0x8] sm:$0xfe] %v619
        %638 = vst [vmem:[#allocation2 + $0x10] sm:$0xfe] %v620
        %639 = vst [vmem:[#allocation2 + $0x18] sm:$0xff] %v622
        %640 = vst [vmem:[#allocation2 + $0x20] sm:$0xff] %v624
        %641 = vst [vmem:[#allocation2 + $0x28] sm:$0xff] %v626
        %642 = vst [vmem:[#allocation2 + $0x30] sm:$0x1] %v621
        %643 = vst [vmem:[#allocation2 + $0x38] sm:$0x1] %v623
        %644 = vst [vmem:[#allocation2 + $0x40] sm:$0x1] %v625
        %v645 = vld [vmem:[#allocation2] sm:$0xff]
        %v646 = vld [vmem:[#allocation2 + $0x18] sm:$0xff]
        %v647 = vld [vmem:[#allocation8] sm:$0x1]
        %v648 = vlaneseq
        %v649 = vshrl.u32 %v648, 7
        %v650 = vsub.s32 0, %v649
        %v651 = vrot.slane %v647, %v650
        %v652 = vmul.f32 %v645, %v651
        %v653 = vmul.f32 %v646, %v651
        %v654 = vadd.f32 %v652, 0.0
        %v655 = vadd.f32 %v653, 0.0
        %v656 = vld [vmem:[#allocation2 + $0x8] sm:$0xff]
        %v657 = vld [vmem:[#allocation2 + $0x20] sm:$0xff]
        %v658 = vld [vmem:[#allocation8 + $0x1] sm:$0x1]
        %v659 = vlaneseq
        %v660 = vshrl.u32 %v659, 7
        %v661 = vsub.s32 0, %v660
        %v662 = vrot.slane %v658, %v661
        %v663 = vmul.f32 %v656, %v662
        %v664 = vmul.f32 %v657, %v662
        %v665 = vadd.f32 %v654, %v663
        %v666 = vadd.f32 %v655, %v664
        %v667 = vld [vmem:[#allocation2 + $0x10] sm:$0xff]
        %v668 = vld [vmem:[#allocation2 + $0x28] sm:$0xff]
        %v669 = vld [vmem:[#allocation8 + $0x2] sm:$0x1]
        %v670 = vlaneseq
        %v671 = vshrl.u32 %v670, 7
        %v672 = vsub.s32 0, %v671
        %v673 = vrot.slane %v669, %v672
        %v674 = vmul.f32 %v667, %v673
        %v675 = vmul.f32 %v668, %v673
        %v676 = vadd.f32 %v665, %v674
        %v677 = vadd.f32 %v666, %v675
        %v678 = vld [vmem:[#allocation2] sm:$0xfe]
        %v679 = vld [vmem:[#allocation2 + $0x30] sm:$0x1]
        %v680 = vld [vmem:[#allocation8 + $0x3] sm:$0x1]
        %v681 = vlaneseq
        %v682 = vshrl.u32 %v681, 7
        %v683 = vsub.s32 0, %v682
        %v684 = vrot.slane %v680, %v683
        %v685 = vmul.f32 %v678, %v684
        %v686 = vmul.f32 %v646, %v684
        %v687 = vmul.f32 %v679, %v684
        %vm691 = vcmask 1046528
        %v692 = vrot.slane %v685, 1
        %v693 = vrot.slane %v686, 1
        %v694 = vsel %vm691, %v692, %v693
        %v695 = vrot.slane %v687, 1
        %v696 = vsel %vm691, %v693, %v695
        %v699 = vadd.f32 %v676, %v694
        %v700 = vadd.f32 %v677, %v696
        %v701 = vld [vmem:[#allocation2 + $0x8] sm:$0xfe]
        %v702 = vld [vmem:[#allocation2 + $0x38] sm:$0x1]
        %v703 = vld [vmem:[#allocation8 + $0x4] sm:$0x1]
        %v704 = vlaneseq
        %v705 = vshrl.u32 %v704, 7
        %v706 = vsub.s32 0, %v705
        %v707 = vrot.slane %v703, %v706
        %v708 = vmul.f32 %v701, %v707
        %v709 = vmul.f32 %v657, %v707
        %v710 = vmul.f32 %v702, %v707
        %v714 = vrot.slane %v708, 1
        %v715 = vrot.slane %v709, 1
        %v716 = vsel %vm691, %v714, %v715
        %v717 = vrot.slane %v710, 1
        %v718 = vsel %vm691, %v715, %v717
        %v721 = vadd.f32 %v699, %v716
        %v722 = vadd.f32 %v700, %v718
        %v723 = vld [vmem:[#allocation2 + $0x10] sm:$0xfe]
        %v724 = vld [vmem:[#allocation2 + $0x40] sm:$0x1]
        %v725 = vld [vmem:[#allocation8 + $0x5] sm:$0x1]
        %v726 = vlaneseq
        %v727 = vshrl.u32 %v726, 7
        %v728 = vsub.s32 0, %v727
        %v729 = vrot.slane %v725, %v728
        %v730 = vmul.f32 %v723, %v729
        %v731 = vmul.f32 %v668, %v729
        %v732 = vmul.f32 %v724, %v729
        %v736 = vrot.slane %v730, 1
        %v737 = vrot.slane %v731, 1
        %v738 = vsel %vm691, %v736, %v737
        %v739 = vrot.slane %v732, 1
        %v740 = vsel %vm691, %v737, %v739
        %v743 = vadd.f32 %v721, %v738
        %v744 = vadd.f32 %v722, %v740
        %v745 = vld [vmem:[#allocation2] sm:$0xfc]
        %v746 = vld [vmem:[#allocation2 + $0x30] sm:$0x3]
        %v747 = vld [vmem:[#allocation8 + $0x6] sm:$0x1]
        %v748 = vlaneseq
        %v749 = vshrl.u32 %v748, 7
        %v750 = vsub.s32 0, %v749
        %v751 = vrot.slane %v747, %v750
        %v752 = vmul.f32 %v745, %v751
        %v753 = vmul.f32 %v646, %v751
        %v754 = vmul.f32 %v746, %v751
        %vm758 = vcmask 1045504
        %v759 = vrot.slane %v752, 2
        %v760 = vrot.slane %v753, 2
        %v761 = vsel %vm758, %v759, %v760
        %v762 = vrot.slane %v754, 2
        %v763 = vsel %vm758, %v760, %v762
        %v766 = vadd.f32 %v743, %v761
        %v767 = vadd.f32 %v744, %v763
        %v768 = vld [vmem:[#allocation2 + $0x8] sm:$0xfc]
        %v769 = vld [vmem:[#allocation2 + $0x38] sm:$0x3]
        %v770 = vld [vmem:[#allocation8 + $0x7] sm:$0x1]
        %v771 = vlaneseq
        %v772 = vshrl.u32 %v771, 7
        %v773 = vsub.s32 0, %v772
        %v774 = vrot.slane %v770, %v773
        %v775 = vmul.f32 %v768, %v774
        %v776 = vmul.f32 %v657, %v774
        %v777 = vmul.f32 %v769, %v774
        %v781 = vrot.slane %v775, 2
        %v782 = vrot.slane %v776, 2
        %v783 = vsel %vm758, %v781, %v782
        %v784 = vrot.slane %v777, 2
        %v785 = vsel %vm758, %v782, %v784
        %v788 = vadd.f32 %v766, %v783
        %v789 = vadd.f32 %v767, %v785
        %v790 = vld [vmem:[#allocation2 + $0x10] sm:$0xfc]
        %v791 = vld [vmem:[#allocation2 + $0x40] sm:$0x3]
        %v792 = vld [vmem:[#allocation8 + $0x8] sm:$0x1]
        %v793 = vlaneseq
        %v794 = vshrl.u32 %v793, 7
        %v795 = vsub.s32 0, %v794
        %v796 = vrot.slane %v792, %v795
        %v797 = vmul.f32 %v790, %v796
        %v798 = vmul.f32 %v668, %v796
        %v799 = vmul.f32 %v791, %v796
        %v803 = vrot.slane %v797, 2
        %v804 = vrot.slane %v798, 2
        %v805 = vsel %vm758, %v803, %v804
        %v806 = vrot.slane %v799, 2
        %v807 = vsel %vm758, %v804, %v806
        %v810 = vadd.f32 %v788, %v805
        %v811 = vadd.f32 %v789, %v807
        %v812 = vld [vmem:[%s5] sm:$0x1]
        %v814 = vlaneseq
        %v815 = vshrl.u32 %v814, 7
        %v816 = vsub.s32 0, %v815
        %v817 = vrot.slane %v812, %v816
        %v819 = vadd.f32 %v810, %v817
        %v820 = vadd.f32 %v811, %v817
        %v821 = vmax.f32 %v819, 0.0
        %v822 = vmax.f32 %v820, 0.0
        %v823 = vmin.f32 %v821, 6.0
        %v824 = vmin.f32 %v822, 6.0
        %v825 = vpack.c.bf16 %v824, %v823
        %v826 = vld [vmem:[#allocation9] sm:$0xf]
        %v827 = vld [vmem:[#allocation9 + $0x4] sm:$0xf]
        %v828 = vld [vmem:[#allocation9 + $0x8] sm:$0xf]
        %v829 = vld [vmem:[#allocation9 + $0xc] sm:$0xf]
        %v830 = vld [vmem:[#allocation9 + $0x10] sm:$0xf]
        %v831 = vld [vmem:[#allocation9 + $0x14] sm:$0xf]
        %v832 = vld [vmem:[#allocation9 + $0x18] sm:$0xf]
        %v833 = vld [vmem:[#allocation9 + $0x1c] sm:$0xf]
        %v834 = vld [vmem:[#allocation9 + $0x20] sm:$0xf]
        %v835 = vld [vmem:[#allocation9 + $0x24] sm:$0xf]
        %v836 = vld [vmem:[#allocation9 + $0x28] sm:$0xf]
        %v837 = vld [vmem:[#allocation9 + $0x2c] sm:$0xf]
        %v838 = vld [vmem:[#allocation9 + $0x30] sm:$0xf]
        %v839 = vld [vmem:[#allocation9 + $0x34] sm:$0xf]
        %v840 = vld [vmem:[#allocation9 + $0x38] sm:$0xf]
        %v841 = vld [vmem:[#allocation9 + $0x3c] sm:$0xf]
        %v842 = vld [vmem:[%s7] sm:$0x1]
        %v844 = vlaneseq
        %v845 = vshrl.u32 %v844, 7
        %v846 = vsub.s32 0, %v845
        %v847 = vrot.slane %v842, %v846
        %v865 = vunpack.c.l.b16 %v826
        %v866 = vunpack.c.l.b16 %v827
        %v867 = vunpack.c.l.b16 %v828
        %v868 = vunpack.c.l.b16 %v829
        %v869 = vunpack.c.l.b16 %v830
        %v870 = vunpack.c.l.b16 %v831
        %v871 = vunpack.c.l.b16 %v832
        %v872 = vunpack.c.l.b16 %v833
        %v873 = vunpack.c.l.b16 %v834
        %v874 = vunpack.c.l.b16 %v835
        %v875 = vunpack.c.l.b16 %v836
        %v876 = vunpack.c.l.b16 %v837
        %v877 = vunpack.c.l.b16 %v838
        %v878 = vunpack.c.l.b16 %v839
        %v879 = vunpack.c.l.b16 %v840
        %v880 = vunpack.c.l.b16 %v841
        %v881 = vpack.c.b16 %v866, %v865
        %v882 = vpack.c.b16 %v868, %v867
        %v883 = vpack.c.b16 %v870, %v869
        %v884 = vpack.c.b16 %v872, %v871
        %v885 = vpack.c.b16 %v874, %v873
        %v886 = vpack.c.b16 %v876, %v875
        %v887 = vpack.c.b16 %v878, %v877
        %v888 = vpack.c.b16 %v880, %v879
        %897 = vmatprep.subr.bf16.mxu0 0
        %898 = vmatpush1.bf16.msra.mxu0 %v881
        %899 = vmatprep.subr.bf16.mxu0 0
        %900 = vmatpush1.bf16.msra.mxu0 %v882
        %901 = vmatprep.subr.bf16.mxu0 0
        %902 = vmatpush1.bf16.msra.mxu0 %v883
        %903 = vmatprep.subr.bf16.mxu0 0
        %904 = vmatpush1.bf16.msra.mxu0 %v884
        %905 = vmatprep.subr.bf16.mxu0 0
        %906 = vmatpush1.bf16.msra.mxu0 %v885
        %907 = vmatprep.subr.bf16.mxu0 0
        %908 = vmatpush1.bf16.msra.mxu0 %v886
        %909 = vmatprep.subr.bf16.mxu0 0
        %910 = vmatpush1.bf16.msra.mxu0 %v887
        %911 = vmatprep.subr.bf16.mxu0 0
        %912 = vmatpush1.bf16.msra.mxu0 %v888
        %913 = vmatprep.subr.bf16.mxu0 0
        %914 = vmatpush1.bf16.msra.mxu0 0
        %915 = vmatprep.subr.bf16.mxu0 0
        %916 = vmatpush1.bf16.msra.mxu0 0
        %917 = vmatprep.subr.bf16.mxu0 0
        %918 = vmatpush1.bf16.msra.mxu0 0
        %919 = vmatprep.subr.bf16.mxu0 0
        %920 = vmatpush1.bf16.msra.mxu0 0
        %921 = vmatprep.subr.bf16.mxu0 0
        %922 = vmatpush1.bf16.msra.mxu0 0
        %923 = vmatprep.subr.bf16.mxu0 0
        %924 = vmatpush1.bf16.msra.mxu0 0
        %925 = vmatprep.subr.bf16.mxu0 0
        %926 = vmatpush1.bf16.msra.mxu0 0
        %927 = vmatprep.subr.bf16.mxu0 0
        %928 = vmatpush1.bf16.msra.mxu0 0
        %929 = vmatprep.mubr.bf16.mxu0 0
        %930 = vmatmul.mubr.bf16.gmra.mrb[0].mxu0 %v825
        %v931 = vpop.f32.mrb[0].mxu0
        %v932 = vadd.f32 %v847, %v931
        %v933 = vpop.f32.mrb[0].mxu0
        %v934 = vpop.f32.mrb[0].mxu0
        %v935 = vadd.f32 %v847, %v934
        %v936 = vpop.f32.mrb[0].mxu0
        %937 = vdwg.mxu0
        %v938 = vadd.f32 %v932, %v600
        %v939 = vadd.f32 %v935, %v601
        %940 = vst [vmem:[%s367] sm:$0xff] %v938
        %941 = vst [vmem:[%s367 + $0x8] sm:$0xff] %v939
        %s942 = sand.u32 %s208, 1
        %s943 = scalar_lea.sflag [#allocation5], %s942
        %s944 = sand.u32 %s208, 1
        %s945 = smul.addr %s944, 16
        %s946 = scalar_lea.vmem [#allocation11], %s945
        // Predicated region
        $region69: #{tpu_custom_call.1} parent=51 // pred_check
          %p947 = pneg %p218
        $region70: #{tpu_custom_call.1} parent=51 // pred_check_branch
          %949 = sbr.rel (%p947) target = $region72
        $region71: #{tpu_custom_call.1} parent=51 // pred_region
          %s951 = ssub.s32 256, 256
          %952 = vsyncadd %s943, %s951
          %s953 = smul.addr %s27, 2
          %s954 = smul.addr %s953, 128
          %s955 = scalar_lea.hbm %s8, %s954
          %s956 = sshll.u32 %s946, 4
          %s957 = int_to_ptr.vmem [resolvable:$true] %s956
          %962 = dma.vmem_to_hbm [thread:$0]  %s957, 256, %s955, %s943, 128, 128, 8
        $region72: #{tpu_custom_call.1} parent=51 // pred_fallthru
          _
      $region52: #{tpu_custom_call.1} parent=5 // pred_fallthru
        _
      %p963 = scmp.le.s32.totalorder 2, %s22
      // Predicated region
      $region73: #{tpu_custom_call.1} parent=5 // pred_check
        %p964 = pneg %p963
      $region74: #{tpu_custom_call.1} parent=5 // pred_check_branch
        %966 = sbr.rel (%p964) target = $region76
      $region75: #{tpu_custom_call.1} parent=5 // pred_region
        %s967 = ssub.s32 %s22, 2
        // Predicated region
        $region77: #{tpu_custom_call.1} parent=75 // pred_check
          %p968 = pneg %p224
        $region78: #{tpu_custom_call.1} parent=75 // pred_check_branch
          %970 = sbr.rel (%p968) target = $region80
        $region79: #{tpu_custom_call.1} parent=75 // pred_region
          %s971 = sand.u32 %s209, 1
          %s972 = scalar_lea.sflag [#allocation5], %s971
          %s973 = sand.u32 %s209, 1
          %s974 = smul.addr %s973, 16
          %s975 = scalar_lea.vmem [#allocation11], %s974
          %976 = dma.done %s972, 256
        $region80: #{tpu_custom_call.1} parent=75 // pred_fallthru
          _
      $region76: #{tpu_custom_call.1} parent=5 // pred_fallthru
        _
    $region6: #{tpu_custom_call.1} parent=1 // loop_footer
      %s26 = sadd.s32 1, %s22
    $region7: #{tpu_custom_call.1} parent=1 // loop_footer_branch
      %21 = sbr.rel target = $region3
    $region8: #{tpu_custom_call.1} parent=1 // loop_exit
      _
    %977 = vsyncpa [#allocation4], 1
    %s978 = scalar_lea.sflag [#allocation4], 1
    %979 = vsyncpa %s978, 1
    %980 = vsyncpa [#allocation7], 1
    %981 = vsyncpa [#allocation10], 1
    %982 = vsyncpa [#allocation5], 1
    %s983 = scalar_lea.sflag [#allocation5], 1
    %984 = vsyncpa %s983, 1

</llo_original>
